<compile_context>
chip_gen: v7x
topology: tpu7x:2x2x1
jax: 0.10.0
libtpu: 0.0.40
codegen_flags: <defaults>
</compile_context>

<pallas_src>
import math

import jax
import jax.numpy as jnp
from jax import lax
from jax.experimental import pallas as pl
from jax.experimental.pallas import tpu as pltpu


# Above the default scoped-VMEM limit on every generation (16/32 MiB), safely
# below v7x's 64 MiB physical VMEM.
_VMEM_LIMIT_BYTES = 48 * 1024 * 1024


def _pick_tile(n, candidates):
    """Largest candidate tile dividing n; fall back to the full extent."""
    for c in candidates:
        if c <= n and n % c == 0:
            return c
    return n


# --------------------------------------------------------------------------
# Linear kernel: y = x @ W + b, tiled, full-width MXU GEMM, f32 accumulation.
# Used once each for the Q/K/V projections and once for the output projection
# (projections are computed once — never re-done per query tile).
# --------------------------------------------------------------------------
def _linear_kernel(x_ref, w_ref, b_ref, o_ref, acc_ref):
    k = pl.program_id(2)

    @pl.when(k == 0)
    def _():
        acc_ref[...] = jnp.zeros_like(acc_ref)

    acc_ref[...] += jnp.dot(x_ref[...], w_ref[...],
                            preferred_element_type=jnp.float32)

    @pl.when(k == pl.num_programs(2) - 1)
    def _():
        o_ref[...] = (acc_ref[...] + b_ref[...]).astype(o_ref.dtype)


def _linear(x, w, b, *, out_dtype):
    """x: (M, K) -> (M, N).  w: (K, N) (in, out), b: (N,)."""
    M, K = x.shape
    _, N = w.shape

    tm = _pick_tile(M, (512, 256, 128, 64, 32, 16, 8))
    tn = _pick_tile(N, (512, 256, 128))
    tk = _pick_tile(K, (512, 256, 128))

    x16 = x.astype(jnp.bfloat16)
    w16 = w.astype(jnp.bfloat16)
    b32 = b.reshape(1, N).astype(jnp.float32)

    return pl.pallas_call(
        _linear_kernel,
        out_shape=jax.ShapeDtypeStruct((M, N), out_dtype),
        grid_spec=pltpu.PrefetchScalarGridSpec(
            num_scalar_prefetch=0,
            grid=(M // tm, N // tn, K // tk),
            in_specs=[
                pl.BlockSpec((tm, tk), lambda i, j, kk: (i, kk)),
                pl.BlockSpec((tk, tn), lambda i, j, kk: (kk, j)),
                pl.BlockSpec((1, tn), lambda i, j, kk: (0, j)),
            ],
            out_specs=pl.BlockSpec((tm, tn), lambda i, j, kk: (i, j)),
            scratch_shapes=[pltpu.VMEM((tm, tn), jnp.float32)],
        ),
        compiler_params=pltpu.CompilerParams(
            dimension_semantics=("parallel", "parallel", "arbitrary"),
            vmem_limit_bytes=_VMEM_LIMIT_BYTES),
    )(x16, w16, b32)


# --------------------------------------------------------------------------
# Flash-style attention kernel: one (batch, head, q-tile, k-tile) per step.
# Online softmax keeps the f32 score tile bounded to (tq, tk).
# --------------------------------------------------------------------------
def _flash_attn_kernel(q_ref, k_ref, v_ref, o_ref, m_ref, l_ref, acc_ref):
    ki = pl.program_id(3)

    @pl.when(ki == 0)
    def _():
        m_ref[...] = jnp.full_like(m_ref, -jnp.inf)
        l_ref[...] = jnp.zeros_like(l_ref)
        acc_ref[...] = jnp.zeros_like(acc_ref)

    q = q_ref[...]                    # (tq, hd) bf16, 1/sqrt(hd) already folded in
    k = k_ref[...]                    # (tk, hd) bf16
    v = v_ref[...]                    # (tk, hd) bf16

    # Q K^T without materializing K^T: contract head_dim of both operands.
    s = lax.dot_general(q, k, (((1,), (1,)), ((), ())),
                        preferred_element_type=jnp.float32)          # (tq, tk)

    m_prev = m_ref[...]
    m_new = jnp.maximum(m_prev, s.max(axis=-1, keepdims=True))
    alpha = jnp.exp(m_prev - m_new)                                   # rescale factor
    p = jnp.exp(s - m_new)

    l_ref[...] = alpha * l_ref[...] + p.sum(axis=-1, keepdims=True)
    acc_ref[...] = alpha * acc_ref[...] + jnp.dot(
        p.astype(jnp.bfloat16), v, preferred_element_type=jnp.float32)
    m_ref[...] = m_new

    @pl.when(ki == pl.num_programs(3) - 1)
    def _():
        # Exact divide (once per output tile) for better numerical parity.
        o_ref[...] = (acc_ref[...] / l_ref[...]).astype(o_ref.dtype)


def _flash_attention(qh, kh, vh, *, block_q=None, block_k=None):
    """qh/kh/vh: (B, H, S, hd) bf16 -> per-head context (B, H, Sq, hd) bf16."""
    B, H, Sq, hd = qh.shape
    Sk = kh.shape[2]

    tq = block_q if block_q is not None else _pick_tile(Sq, (256, 128, 64, 32, 16, 8))
    tk = block_k if block_k is not None else _pick_tile(Sk, (512, 256, 128, 64, 32, 16, 8))
    assert Sq % tq == 0 and Sk % tk == 0

    return pl.pallas_call(
        _flash_attn_kernel,
        out_shape=jax.ShapeDtypeStruct((B, H, Sq, hd), jnp.bfloat16),
        grid_spec=pltpu.PrefetchScalarGridSpec(
            num_scalar_prefetch=0,
            grid=(B, H, Sq // tq, Sk // tk),
            in_specs=[
                pl.BlockSpec((None, None, tq, hd), lambda b, h, qi, ki: (b, h, qi, 0)),
                pl.BlockSpec((None, None, tk, hd), lambda b, h, qi, ki: (b, h, ki, 0)),
                pl.BlockSpec((None, None, tk, hd), lambda b, h, qi, ki: (b, h, ki, 0)),
            ],
            out_specs=pl.BlockSpec((None, None, tq, hd),
                                   lambda b, h, qi, ki: (b, h, qi, 0)),
            scratch_shapes=[
                pltpu.VMEM((tq, 1), jnp.float32),    # running max
                pltpu.VMEM((tq, 1), jnp.float32),    # running sum
                pltpu.VMEM((tq, hd), jnp.float32),   # un-normalized context
            ],
        ),
        compiler_params=pltpu.CompilerParams(
            dimension_semantics=("parallel", "parallel", "parallel", "arbitrary"),
            vmem_limit_bytes=_VMEM_LIMIT_BYTES),
    )(qh, kh, vh)


# --------------------------------------------------------------------------
# Full MultiHeadAttention forward.
# --------------------------------------------------------------------------
def multi_head_attention(q, k, v, params, *, num_heads, block_q=None, block_k=None):
    """params: dict with 'wq','bq','wk','bk','wv','bv','wo','bo'.

    Weights are (d_model, d_model) stored as (in, out); biases are (d_model,).
    Returns (batch, seq_len_q, d_model) in q.dtype.
    """
    B, Sq, D = q.shape
    _, Sk, _ = k.shape
    hd = D // num_heads
    out_dtype = q.dtype

    # Fold 1/sqrt(head_dim) into the Q projection (one-time (D,D) scale;
    # exactly equivalent to scaling Q after the projection).
    scale = 1.0 / math.sqrt(hd)
    wq = params["wq"] * scale
    bq = params["bq"] * scale

    # --- Q/K/V projections: full-width (·,D)x(D,D) GEMMs, computed once.
    q_proj = _linear(q.reshape(B * Sq, D), wq, bq, out_dtype=jnp.bfloat16)
    k_proj = _linear(k.reshape(B * Sk, D), params["wk"], params["bk"],
                     out_dtype=jnp.bfloat16)
    v_proj = _linear(v.reshape(B * Sk, D), params["wv"], params["bv"],
                     out_dtype=jnp.bfloat16)

    # Per-head layout (B, H, S, hd) — layout plumbing in the wrapper only.
    qh = q_proj.reshape(B, Sq, num_heads, hd).transpose(0, 2, 1, 3)
    kh = k_proj.reshape(B, Sk, num_heads, hd).transpose(0, 2, 1, 3)
    vh = v_proj.reshape(B, Sk, num_heads, hd).transpose(0, 2, 1, 3)

    # --- Flash attention with online softmax over Sk tiles.
    ctx = _flash_attention(qh, kh, vh, block_q=block_q, block_k=block_k)

    # --- Output projection: one full-width (·,D)x(D,D) GEMM over all heads.
    ctx = ctx.transpose(0, 2, 1, 3).reshape(B * Sq, D)
    out = _linear(ctx, params["wo"], params["bo"], out_dtype=out_dtype)
    return out.reshape(B, Sq, D)


def _reference_mha(q, k, v, params, *, num_heads):
    """Pure-JAX f32 reference mirroring the PyTorch forward (eval mode)."""
    B, Sq, D = q.shape
    hd = D // num_heads

    def linear(x, w, b):  # w is (in, out)
        return x @ w + b

    qp = linear(q, params["wq"], params["bq"]).reshape(B, Sq, num_heads, hd).transpose(0, 2, 1, 3)
    kp = linear(k, params["wk"], params["bk"]).reshape(B, -1, num_heads, hd).transpose(0, 2, 1, 3)
    vp = linear(v, params["wv"], params["bv"]).reshape(B, -1, num_heads, hd).transpose(0, 2, 1, 3)

    scores = jnp.einsum("bhqd,bhkd->bhqk", qp, kp) / math.sqrt(hd)
    attn = jax.nn.softmax(scores, axis=-1)
    out = jnp.einsum("bhqk,bhkd->bhqd", attn, vp)
    out = out.transpose(0, 2, 1, 3).reshape(B, Sq, D)
    return linear(out, params["wo"], params["bo"])


if __name__ == "__main__":
    # Small, module-consistent shapes.
    batch, seq, d_model, num_heads = 2, 8, 32, 4

    key = jax.random.PRNGKey(0)
    keys = jax.random.split(key, 12)

    bound = 1.0 / math.sqrt(d_model)  # nn.Linear default-ish init scale
    def w_init(kk):
        return jax.random.uniform(kk, (d_model, d_model), jnp.float32, -bound, bound)
    def b_init(kk):
        return jax.random.uniform(kk, (d_model,), jnp.float32, -bound, bound)

    params = {
        "wq": w_init(keys[0]), "bq": b_init(keys[1]),
        "wk": w_init(keys[2]), "bk": b_init(keys[3]),
        "wv": w_init(keys[4]), "bv": b_init(keys[5]),
        "wo": w_init(keys[6]), "bo": b_init(keys[7]),
    }

    q = jax.random.normal(keys[8], (batch, seq, d_model), jnp.float32)
    k = jax.random.normal(keys[9], (batch, seq, d_model), jnp.float32)
    v = jax.random.normal(keys[10], (batch, seq, d_model), jnp.float32)

    out = multi_head_attention(q, k, v, params, num_heads=num_heads)
    out = jax.block_until_ready(out)

    ref = _reference_mha(q, k, v, params, num_heads=num_heads)
    assert out.shape == (batch, seq, d_model)
    # bf16 MXU operands -> compare against the f32 reference with a tolerance
    # consistent with bf16 precision.
    assert jnp.allclose(out, ref, atol=5e-2, rtol=5e-2), "mismatch vs reference"

    print("KERNEL_OK")
</pallas_src>

<mosaic_0001>
module attributes {stable_mosaic.version = 11 : i64} {
  func.func @_linear_kernel(%arg0: i32, %arg1: i32, %arg2: i32, %arg3: memref<16x32xbf16, #tpu.memory_space<vmem>>, %arg4: memref<32x32xbf16, #tpu.memory_space<vmem>>, %arg5: memref<1x32xf32, #tpu.memory_space<vmem>>, %arg6: memref<16x32xbf16, #tpu.memory_space<vmem>>, %arg7: memref<16x32xf32, #tpu.memory_space<vmem>>) attributes {dimension_semantics = [#tpu.dimension_semantics<parallel>, #tpu.dimension_semantics<parallel>, #tpu.dimension_semantics<arbitrary>], iteration_bounds = array<i64: 1, 1, 1>, scalar_prefetch = 0 : i64, scratch_operands = 1 : i64, tpu.core_type = #tpu.core_type<tc>, window_params = [{transform_indices = @transform_0, window_bounds = array<i64: 16, 32>}, {transform_indices = @transform_1, window_bounds = array<i64: 32, 32>}, {transform_indices = @transform_2, window_bounds = array<i64: 1, 32>}, {transform_indices = @transform_3, window_bounds = array<i64: 16, 32>}]} {
    %c0_i32 = arith.constant 0 : i32
    %0 = arith.cmpi eq, %arg2, %c0_i32 : i32
    %1 = arith.extui %0 : i1 to i32
    %c0_i32_0 = arith.constant 0 : i32
    %2 = arith.cmpi ne, %1, %c0_i32_0 : i32
    scf.if %2 {
      %cst_10 = arith.constant 0.000000e+00 : f32
      %12 = vector.broadcast %cst_10 : f32 to vector<16x32xf32>
      %c0_11 = arith.constant 0 : index
      %c0_12 = arith.constant 0 : index
      %13 = vector.load %arg7[%c0_11, %c0_12] : memref<16x32xf32, #tpu.memory_space<vmem>>, vector<16x32xf32>
      tpu.vector_store %arg7[%c0_11, %c0_12], %12 {strides = array<i32>} : memref<16x32xf32, #tpu.memory_space<vmem>>, vector<16x32xf32>,
    } else {
    }
    %c0 = arith.constant 0 : index
    %c0_1 = arith.constant 0 : index
    %3 = vector.load %arg7[%c0, %c0_1] : memref<16x32xf32, #tpu.memory_space<vmem>>, vector<16x32xf32>
    %c0_2 = arith.constant 0 : index
    %c0_3 = arith.constant 0 : index
    %4 = vector.load %arg3[%c0_2, %c0_3] : memref<16x32xbf16, #tpu.memory_space<vmem>>, vector<16x32xbf16>
    %c0_4 = arith.constant 0 : index
    %c0_5 = arith.constant 0 : index
    %5 = vector.load %arg4[%c0_4, %c0_5] : memref<32x32xbf16, #tpu.memory_space<vmem>>, vector<32x32xbf16>
    %cst = arith.constant dense<0.000000e+00> : vector<16x32xf32>
    %6 = tpu.matmul %4, %5, %cst {dimension_numbers = #tpu.dot_dimension_numbers<[1], [0], [0], [1], [0, 0, 1, 1], [], []>} : vector<16x32xbf16>, vector<32x32xbf16>, vector<16x32xf32> -> vector<16x32xf32>
    %7 = arith.addf %3, %6 : vector<16x32xf32>
    %c0_6 = arith.constant 0 : index
    %c0_7 = arith.constant 0 : index
    %8 = vector.load %arg7[%c0_6, %c0_7] : memref<16x32xf32, #tpu.memory_space<vmem>>, vector<16x32xf32>
    tpu.vector_store %arg7[%c0_6, %c0_7], %7 {strides = array<i32>} : memref<16x32xf32, #tpu.memory_space<vmem>>, vector<16x32xf32>,
    %c0_i32_8 = arith.constant 0 : i32
    %9 = arith.cmpi eq, %arg2, %c0_i32_8 : i32
    %10 = arith.extui %9 : i1 to i32
    %c0_i32_9 = arith.constant 0 : i32
    %11 = arith.cmpi ne, %10, %c0_i32_9 : i32
    scf.if %11 {
      %c0_10 = arith.constant 0 : index
      %c0_11 = arith.constant 0 : index
      %12 = vector.load %arg7[%c0_10, %c0_11] : memref<16x32xf32, #tpu.memory_space<vmem>>, vector<16x32xf32>
      %c0_12 = arith.constant 0 : index
      %c0_13 = arith.constant 0 : index
      %13 = vector.load %arg5[%c0_12, %c0_13] : memref<1x32xf32, #tpu.memory_space<vmem>>, vector<1x32xf32>
      %14 = vector.broadcast %13 : vector<1x32xf32> to vector<16x32xf32>
      %15 = arith.addf %12, %14 : vector<16x32xf32>
      %16 = arith.truncf %15 : vector<16x32xf32> to vector<16x32xbf16>
      %c0_14 = arith.constant 0 : index
      %c0_15 = arith.constant 0 : index
      %17 = vector.load %arg6[%c0_14, %c0_15] : memref<16x32xbf16, #tpu.memory_space<vmem>>, vector<16x32xbf16>
      tpu.vector_store %arg6[%c0_14, %c0_15], %16 {strides = array<i32>} : memref<16x32xbf16, #tpu.memory_space<vmem>>, vector<16x32xbf16>,
    } else {
    }
    return
  }
  func.func @transform_0(%arg0: i32, %arg1: i32, %arg2: i32) -> (i32, i32) {
    %c0_i32 = arith.constant 0 : i32
    return %arg0, %arg2 : i32, i32
  }
  func.func @transform_1(%arg0: i32, %arg1: i32, %arg2: i32) -> (i32, i32) {
    %c0_i32 = arith.constant 0 : i32
    return %arg2, %arg1 : i32, i32
  }
  func.func @transform_2(%arg0: i32, %arg1: i32, %arg2: i32) -> (i32, i32) {
    %c0_i32 = arith.constant 0 : i32
    %c0_i32_0 = arith.constant 0 : i32
    return %c0_i32, %arg1 : i32, i32
  }
  func.func @transform_3(%arg0: i32, %arg1: i32, %arg2: i32) -> (i32, i32) {
    %c0_i32 = arith.constant 0 : i32
    return %arg0, %arg1 : i32, i32
  }
}

</mosaic_0001>

<llo_original>
// kernel: tpu_custom_call.1
$region0: #{tpu_custom_call.1}
  #allocation0 [shape = 'u32[]', space=smem, size = 0x4, offset = 0x4, fixed_abs, tag = 'smem constant byte address 0x4 - core index']
  #allocation1 [shape = 'u32[144,128]{1,0:T(1,128)}', space=vmem, size = 0x12000, scoped, tag = 'internal scratch']
  #allocation2 [shape = 'f32[16,32]{1,0:T(8,128)}', space=vmem, size = 0x2000, scoped, tag = 'scratch operand']
  %s0 = inlined_call_operand.hbm [shape: bf16[16,32], index: 0, kind: input, shape index: {}]
  %s1 = inlined_call_operand.hbm [shape: bf16[32,32], index: 1, kind: input, shape index: {}]
  %s2 = inlined_call_operand.vmem [shape: f32[1,32], index: 2, kind: input, shape index: {}]
  %s3 = inlined_call_operand.hbm [shape: bf16[16,32], index: 3, kind: output, shape index: {}]
  %s4 = sld [smem:[#allocation0]]
  $region38: #{tpu_custom_call.1} parent=0
    _
  %s6 = ssub.s32 1, %s4
  %s7 = scalar_select 0, %s6, %s4
  $region1: #{tpu_custom_call.1} parent=0
    #allocation3 [shape = 'u8[4096]{0}', space=vmem, size = 0x1000, scoped, tag = 'input window, operand 0, single buffered']
    #allocation4 [shape = 's32[1]{0}', space=sflag, size = 0x4, scoped, tag = 'scoped memory for tpu_custom_call.1']
    #allocation5 [shape = 's32[1]{0}', space=sflag, size = 0x4, scoped, tag = 'scoped memory for tpu_custom_call.1']
    #allocation6 [shape = 'u8[8192]{0}', space=vmem, size = 0x2000, scoped, tag = 'input window, operand 1, single buffered']
    #allocation7 [shape = 's32[1]{0}', space=sflag, size = 0x4, scoped, tag = 'scoped memory for tpu_custom_call.1']
    #allocation8 [shape = 'u8[4096]{0}', space=vmem, size = 0x1000, scoped, tag = 'output window, operand 0, single buffered']
    %8 = vsyncpa [#allocation4], 0
    %9 = vsyncpa [#allocation7], 0
    %10 = vsyncpa [#allocation5], 0
    // Predicated region
    $region2: #{tpu_custom_call.1} parent=1 // pred_check
      _
    $region3: #{tpu_custom_call.1} parent=1 // pred_check_branch
      %12 = sbr.rel (0) target = $region5
    $region4: #{tpu_custom_call.1} parent=1 // pred_region
      %s14 = ssub.s32 128, 128
      %15 = vsyncadd [#allocation4], %s14
      %s16 = sshll.u32 [#allocation3], 4
      %s17 = int_to_ptr.vmem [resolvable:$true] %s16
      %22 = dma.hbm_to_vmem [thread:$0]  %s0, 128, %s17, [#allocation4], 64, 64, 4
    $region5: #{tpu_custom_call.1} parent=1 // pred_fallthru
      _
    // Predicated region
    $region6: #{tpu_custom_call.1} parent=1 // pred_check
      _
    $region7: #{tpu_custom_call.1} parent=1 // pred_check_branch
      %24 = sbr.rel (0) target = $region9
    $region8: #{tpu_custom_call.1} parent=1 // pred_region
      %s26 = ssub.s32 256, 256
      %27 = vsyncadd [#allocation7], %s26
      %s28 = sshll.u32 [#allocation6], 4
      %s29 = int_to_ptr.vmem [resolvable:$true] %s28
      %34 = dma.hbm_to_vmem [thread:$0]  %s1, 256, %s29, [#allocation7], 64, 64, 4
    $region9: #{tpu_custom_call.1} parent=1 // pred_fallthru
      _
    // Predicated region
    $region10: #{tpu_custom_call.1} parent=1 // pred_check
      _
    $region11: #{tpu_custom_call.1} parent=1 // pred_check_branch
      %36 = sbr.rel (0) target = $region13
    $region12: #{tpu_custom_call.1} parent=1 // pred_region
      _
    $region13: #{tpu_custom_call.1} parent=1 // pred_fallthru
      _
    // Predicated region
    $region14: #{tpu_custom_call.1} parent=1 // pred_check
      _
    $region15: #{tpu_custom_call.1} parent=1 // pred_check_branch
      %38 = sbr.rel (0) target = $region17
    $region16: #{tpu_custom_call.1} parent=1 // pred_region
      %39 = dma.done [#allocation4], 128
    $region17: #{tpu_custom_call.1} parent=1 // pred_fallthru
      _
    // Predicated region
    $region18: #{tpu_custom_call.1} parent=1 // pred_check
      _
    $region19: #{tpu_custom_call.1} parent=1 // pred_check_branch
      %41 = sbr.rel (0) target = $region21
    $region20: #{tpu_custom_call.1} parent=1 // pred_region
      %42 = dma.done [#allocation7], 256
    $region21: #{tpu_custom_call.1} parent=1 // pred_fallthru
      _
    %p44 = scmp.eq.s32.totalorder 0, 0
    // Predicated region
    $region22: #{tpu_custom_call.1} parent=1 // pred_check
      %p45 = pneg %p44
    $region23: #{tpu_custom_call.1} parent=1 // pred_check_branch
      %47 = sbr.rel (%p45) target = $region25
    $region24: #{tpu_custom_call.1} parent=1 // pred_region
      %vm48 = vcmask 261120
      %49 = vst.msk [vmem:[#allocation2] sm:$0xff] %vm48, 0.0
      %50 = vst.msk [vmem:[#allocation2 + $0x8] sm:$0xff] %vm48, 0.0
    $region25: #{tpu_custom_call.1} parent=1 // pred_fallthru
      _
    %v51 = vld [vmem:[#allocation2] sm:$0xff]
    %v52 = vld [vmem:[#allocation2 + $0x8] sm:$0xff]
    %v53 = vld [vmem:[#allocation3] sm:$0xf]
    %v54 = vld [vmem:[#allocation3 + $0x4] sm:$0xf]
    %v55 = vld [vmem:[#allocation6] sm:$0xf]
    %v56 = vld [vmem:[#allocation6 + $0x4] sm:$0xf]
    %v57 = vld [vmem:[#allocation6 + $0x8] sm:$0xf]
    %v58 = vld [vmem:[#allocation6 + $0xc] sm:$0xf]
    %v61 = vunpack.c.l.b16 %v53
    %v62 = vunpack.c.l.b16 %v54
    %v63 = vpack.c.b16 %v62, %v61
    %v68 = vunpack.c.l.b16 %v55
    %v69 = vunpack.c.l.b16 %v56
    %v70 = vunpack.c.l.b16 %v57
    %v71 = vunpack.c.l.b16 %v58
    %v72 = vpack.c.b16 %v69, %v68
    %v73 = vpack.c.b16 %v71, %v70
    %vm76 = vcmask 261120
    %v78 = vsel %vm76, %v63, 0
    %80 = vmatprep.subr.bf16.mxu0 0
    %81 = vmatpush1.bf16.msra.mxu0 %v72
    %82 = vmatprep.subr.bf16.mxu0 0
    %83 = vmatpush1.bf16.msra.mxu0 %v73
    %84 = vmatprep.subr.bf16.mxu0 0
    %85 = vmatpush1.bf16.msra.mxu0 0
    %86 = vmatprep.subr.bf16.mxu0 0
    %87 = vmatpush1.bf16.msra.mxu0 0
    %88 = vmatprep.subr.bf16.mxu0 0
    %89 = vmatpush1.bf16.msra.mxu0 0
    %90 = vmatprep.subr.bf16.mxu0 0
    %91 = vmatpush1.bf16.msra.mxu0 0
    %92 = vmatprep.subr.bf16.mxu0 0
    %93 = vmatpush1.bf16.msra.mxu0 0
    %94 = vmatprep.subr.bf16.mxu0 0
    %95 = vmatpush1.bf16.msra.mxu0 0
    %96 = vmatprep.subr.bf16.mxu0 0
    %97 = vmatpush1.bf16.msra.mxu0 0
    %98 = vmatprep.subr.bf16.mxu0 0
    %99 = vmatpush1.bf16.msra.mxu0 0
    %100 = vmatprep.subr.bf16.mxu0 0
    %101 = vmatpush1.bf16.msra.mxu0 0
    %102 = vmatprep.subr.bf16.mxu0 0
    %103 = vmatpush1.bf16.msra.mxu0 0
    %104 = vmatprep.subr.bf16.mxu0 0
    %105 = vmatpush1.bf16.msra.mxu0 0
    %106 = vmatprep.subr.bf16.mxu0 0
    %107 = vmatpush1.bf16.msra.mxu0 0
    %108 = vmatprep.subr.bf16.mxu0 0
    %109 = vmatpush1.bf16.msra.mxu0 0
    %110 = vmatprep.subr.bf16.mxu0 0
    %111 = vmatpush1.bf16.msra.mxu0 0
    %112 = vmatprep.mubr.bf16.mxu0 0
    %113 = vmatmul.mubr.bf16.gmra.mrb[0].mxu0 %v78
    %v114 = vpop.f32.mrb[0].mxu0
    %v115 = vadd.f32 0.0, %v114
    %v116 = vpop.f32.mrb[0].mxu0
    %v117 = vpop.f32.mrb[0].mxu0
    %v118 = vadd.f32 0.0, %v117
    %v119 = vpop.f32.mrb[0].mxu0
    %120 = vdwg.mxu0
    %v121 = vadd.f32 %v51, %v115
    %v122 = vadd.f32 %v52, %v118
    %123 = vst.msk [vmem:[#allocation2] sm:$0xff] %vm76, %v121
    %124 = vst.msk [vmem:[#allocation2 + $0x8] sm:$0xff] %vm76, %v122
    // Predicated region
    $region26: #{tpu_custom_call.1} parent=1 // pred_check
      %p125 = pneg %p44
    $region27: #{tpu_custom_call.1} parent=1 // pred_check_branch
      %127 = sbr.rel (%p125) target = $region29
    $region28: #{tpu_custom_call.1} parent=1 // pred_region
      %v128 = vld [vmem:[#allocation2] sm:$0xff]
      %v129 = vld [vmem:[#allocation2 + $0x8] sm:$0xff]
      %v130 = vld [vmem:[%s2] sm:$0x1]
      %v132 = vlaneseq
      %v133 = vshrl.u32 %v132, 7
      %v134 = vsub.s32 0, %v133
      %v135 = vrot.slane %v130, %v134
      %v137 = vadd.f32 %v128, %v135
      %v138 = vadd.f32 %v129, %v135
      %v139 = vpack.c.bf16 %v138, %v137
      %v141 = vunpack.c.l.b16 %v139
      %v142 = vunpack.c.h.b16 %v139
      %v143 = vpack.c.b16 %v141, %v141
      %v144 = vpack.c.b16 %v142, %v142
      %vm147 = vcmask 257024
      %148 = vst.msk [vmem:[#allocation8] sm:$0xf] %vm147, %v143
      %149 = vst.msk [vmem:[#allocation8 + $0x4] sm:$0xf] %vm147, %v144
    $region29: #{tpu_custom_call.1} parent=1 // pred_fallthru
      _
    // Predicated region
    $region30: #{tpu_custom_call.1} parent=1 // pred_check
      _
    $region31: #{tpu_custom_call.1} parent=1 // pred_check_branch
      %151 = sbr.rel (0) target = $region33
    $region32: #{tpu_custom_call.1} parent=1 // pred_region
      %s153 = ssub.s32 128, 128
      %154 = vsyncadd [#allocation5], %s153
      %s155 = sshll.u32 [#allocation8], 4
      %s156 = int_to_ptr.vmem [resolvable:$true] %s155
      %161 = dma.vmem_to_hbm [thread:$0]  %s156, 128, %s3, [#allocation5], 64, 64, 4
    $region33: #{tpu_custom_call.1} parent=1 // pred_fallthru
      _
    // Predicated region
    $region34: #{tpu_custom_call.1} parent=1 // pred_check
      _
    $region35: #{tpu_custom_call.1} parent=1 // pred_check_branch
      %163 = sbr.rel (0) target = $region37
    $region36: #{tpu_custom_call.1} parent=1 // pred_region
      %164 = dma.done [#allocation5], 128
    $region37: #{tpu_custom_call.1} parent=1 // pred_fallthru
      _
    %165 = vsyncpa [#allocation4], 1
    %166 = vsyncpa [#allocation7], 1
    %167 = vsyncpa [#allocation5], 1

</llo_original>
